<compile_context>
chip_gen: v5e
topology: v5e:2x2
jax: 0.10.0
libtpu: 0.0.40
codegen_flags: <defaults>
</compile_context>

<pallas_src>
import jax
import jax.numpy as jnp
from jax.experimental import pallas as pl
from jax.experimental.pallas import tpu as pltpu

_LANE = 128     # lane width (last dim)
_SUBLANE = 8    # f32 sublane width (second-to-last dim)
_MIB = 1024 * 1024


def _round_up(x: int, m: int) -> int:
    return ((x + m - 1) // m) * m


def _cdiv(a: int, b: int) -> int:
    return -(-a // b)


def _make_mlp_kernel(num_layers: int):
    """Fused MLP kernel for `num_layers` Linear layers.

    Kernel args: x_ref, w0_ref, b0_ref, ..., w{L-1}_ref, b{L-1}_ref, out_ref.
    ReLU is applied after every layer except the last one.
    """

    def kernel(x_ref, *refs):
        param_refs = refs[:-1]
        out_ref = refs[-1]

        h = x_ref[...]                                   # (TB, in)
        for i in range(num_layers):
            w = param_refs[2 * i][...]                   # (in_i, out_i)
            b = param_refs[2 * i + 1][...]               # (1, out_i) f32
            # Matmul on the MXU, f32 accumulation; bias-add / ReLU in f32 (VPU).
            h = jnp.dot(h.astype(w.dtype), w, preferred_element_type=jnp.float32)
            h = h + b.astype(jnp.float32)
            if i < num_layers - 1:
                h = jnp.maximum(h, 0.0)                  # ReLU
        out_ref[...] = h.astype(out_ref.dtype)

    return kernel


def _vmem_physical_bytes() -> int:
    """Per-core VMEM capacity (v5e/v6e: 128 MiB, v7x: 64 MiB)."""
    try:
        return int(pltpu.get_tpu_info().vmem_capacity_bytes)
    except Exception:
        return 64 * _MIB  # conservative fallback (v7x per-TC)


def _choose_tiling(batch, in_dim, widths, block_batch, tile_budget_bytes, in_bytes):
    """Pick (steps, tb, padded_batch): minimal padding, even multi-step grids."""
    rb = max(_SUBLANE, _round_up(batch, _SUBLANE))
    steps = max(1, _cdiv(rb, max(_SUBLANE, int(block_batch))))
    while True:
        # Even step count keeps v7x's two TensorCores balanced; never split a
        # single-tile batch artificially (the grid is a serial loop per core).
        if steps > 1 and steps % 2 == 1:
            steps += 1
        tb = _round_up(_cdiv(rb, steps), _SUBLANE)
        # Double-buffered x/out tiles + f32 per-layer activation temporaries.
        need = (2 * tb * in_dim * in_bytes
                + 2 * tb * widths[-1] * 4
                + 4 * sum(tb * w for w in widths))
        if need <= tile_budget_bytes or tb <= _SUBLANE:
            return steps, tb, steps * tb
        steps *= 2


def mlp_forward_pallas(x, params, *, block_batch: int = 4096, use_bf16: bool = False):
    """Run the fused MLP Pallas kernel.

    Args:
      x: [batch, input_size] float32
      params: list of (W, b) with W: [in, out], b: [1, out]
      block_batch: target rows per grid step (tile auto-shrunk to fit VMEM).
      use_bf16: cast x / W to bfloat16 (f32 accumulation) to halve HBM reads.
    Returns:
      [batch, output_size] float32
    """
    num_layers = len(params)
    batch, in_dim = x.shape
    out_dim = params[-1][0].shape[1]
    widths = [w.shape[1] for w, _ in params]

    compute_dtype = jnp.bfloat16 if use_bf16 else jnp.float32
    in_bytes = int(jnp.dtype(compute_dtype).itemsize)

    # Weights in compute dtype; biases stay f32 (bias-add / ReLU done in f32).
    flat_params = []
    for w, b in params:
        flat_params.append(w.astype(compute_dtype))
        flat_params.append(b.astype(jnp.float32))
    param_bytes = sum(int(p.size) * int(p.dtype.itemsize) for p in flat_params)

    # ---- Generation-aware VMEM budget with headroom (≈56 MiB v7x, ≈112 MiB v5e/v6e).
    vmem_cap = (_vmem_physical_bytes() * 7) // 8
    # Budget for the batch-tiled working set; params are VMEM residents and are
    # still double-buffered by the pipeline even though their block index is
    # constant, so reserve ~2x their size.
    tile_budget = max(8 * _MIB, vmem_cap // 2 - 2 * param_bytes)

    steps, tb, padded_batch = _choose_tiling(
        batch, in_dim, widths, block_batch, tile_budget, in_bytes)

    x = x.astype(compute_dtype)
    if padded_batch != batch:
        x = jnp.pad(x, ((0, padded_batch - batch), (0, 0)))
    grid = (steps,)

    # x / out are batch-tiled; weights & biases are full-array VMEM residents.
    # No lane padding of the output: a block last-dim equal to the full array
    # last-dim is legal, and with out_dim=1 writeback is 4 B/row (was 512).
    in_specs = [pl.BlockSpec((tb, in_dim), lambda i: (i, 0))]
    for w, b in zip(flat_params[0::2], flat_params[1::2]):
        in_specs.append(pl.BlockSpec(w.shape, lambda i: (0, 0)))
        in_specs.append(pl.BlockSpec(b.shape, lambda i: (0, 0)))
    out_spec = pl.BlockSpec((tb, out_dim), lambda i: (i, 0))

    # ---- Advisory cost estimate (helps XLA scheduling in larger graphs). ----
    dims = [in_dim] + widths
    flops = int(sum(2 * padded_batch * a * c for a, c in zip(dims[:-1], dims[1:])))
    bytes_accessed = int(padded_batch * in_dim * in_bytes
                         + param_bytes
                         + padded_batch * out_dim * 4)
    cost = pl.CostEstimate(flops=flops, transcendentals=0,
                           bytes_accessed=bytes_accessed)

    # ---- VMEM limit: actual need with 2x slack, clamped below the cap. ----
    tile_bytes = (2 * tb * in_dim * in_bytes
                  + 2 * tb * out_dim * 4
                  + 4 * sum(tb * w for w in widths))
    vmem_limit = int(min(vmem_cap, max(32 * _MIB, 2 * (tile_bytes + 2 * param_bytes))))

    kernel = _make_mlp_kernel(num_layers)
    out = pl.pallas_call(
        kernel,
        out_shape=jax.ShapeDtypeStruct((padded_batch, out_dim), jnp.float32),
        grid=grid,
        in_specs=in_specs,
        out_specs=out_spec,
        compiler_params=pltpu.CompilerParams(
            dimension_semantics=("parallel",),
            vmem_limit_bytes=vmem_limit,
        ),
        cost_estimate=cost,
    )(x, *flat_params)

    return out[:batch]


def mlp_forward_ref(x, params):
    """Pure-JAX reference for correctness checking."""
    h = x
    num_layers = len(params)
    for i, (w, b) in enumerate(params):
        h = h @ w + b
        if i < num_layers - 1:
            h = jnp.maximum(h, 0.0)
    return h


def init_params(key, input_size, hidden_sizes, output_size):
    """Deterministic parameter init (uniform, PyTorch-Linear-style bounds)."""
    sizes = [input_size] + list(hidden_sizes) + [output_size]
    params = []
    for i in range(len(sizes) - 1):
        fan_in, fan_out = sizes[i], sizes[i + 1]
        key, wk, bk = jax.random.split(key, 3)
        bound = 1.0 / jnp.sqrt(fan_in)
        w = jax.random.uniform(
            wk, (fan_in, fan_out), jnp.float32, minval=-bound, maxval=bound
        )
        b = jax.random.uniform(
            bk, (1, fan_out), jnp.float32, minval=-bound, maxval=bound
        )
        params.append((w, b))
    return params


if __name__ == "__main__":
    # Module-consistent shapes.
    input_size = 32
    hidden_sizes = [64, 32]
    output_size = 1
    dropout_rate = 0.1  # identity at eval time

    key = jax.random.PRNGKey(0)
    params = init_params(key, input_size, hidden_sizes, output_size)

    # Small batch (single grid step, single tile).
    key, xk = jax.random.split(key)
    x_small = jax.random.normal(xk, (8, input_size), jnp.float32)
    out_small = jax.block_until_ready(mlp_forward_pallas(x_small, params))
    ref_small = mlp_forward_ref(x_small, params)
    assert out_small.shape == (8, output_size), out_small.shape
    assert jnp.allclose(out_small, ref_small, atol=1e-5, rtol=1e-5)

    # Ragged larger batch (single big tile, minimal padding).
    key, xk = jax.random.split(key)
    x_big = jax.random.normal(xk, (600, input_size), jnp.float32)
    out_big = jax.block_until_ready(mlp_forward_pallas(x_big, params))
    ref_big = mlp_forward_ref(x_big, params)
    assert out_big.shape == (600, output_size), out_big.shape
    assert jnp.allclose(out_big, ref_big, atol=1e-5, rtol=1e-5)

    # Multi-step grid path (forces several tiles / even step count for v7x).
    out_multi = jax.block_until_ready(
        mlp_forward_pallas(x_big, params, block_batch=128))
    assert out_multi.shape == (600, output_size), out_multi.shape
    assert jnp.allclose(out_multi, ref_big, atol=1e-5, rtol=1e-5)

    # Optional bf16 compute path (halved HBM reads; looser tolerance).
    out_bf16 = jax.block_until_ready(
        mlp_forward_pallas(x_big, params, use_bf16=True))
    assert out_bf16.shape == (600, output_size), out_bf16.shape
    assert jnp.allclose(out_bf16, ref_big, atol=5e-2, rtol=5e-2)

    print("KERNEL_OK")
</pallas_src>

<mosaic_0001>
module attributes {stable_mosaic.version = 11 : i64} {
  func.func @kernel(%arg0: i32, %arg1: memref<8x32xf32, #tpu.memory_space<vmem>>, %arg2: memref<32x64xf32, #tpu.memory_space<vmem>>, %arg3: memref<1x64xf32, #tpu.memory_space<vmem>>, %arg4: memref<64x32xf32, #tpu.memory_space<vmem>>, %arg5: memref<1x32xf32, #tpu.memory_space<vmem>>, %arg6: memref<32x1xf32, #tpu.memory_space<vmem>>, %arg7: memref<1x1xf32, #tpu.memory_space<vmem>>, %arg8: memref<8x1xf32, #tpu.memory_space<vmem>>) attributes {dimension_semantics = [#tpu.dimension_semantics<parallel>], iteration_bounds = array<i64: 1>, scalar_prefetch = 0 : i64, scratch_operands = 0 : i64, tpu.core_type = #tpu.core_type<tc>, window_params = [{transform_indices = @transform_0, window_bounds = array<i64: 8, 32>}, {pipeline_mode = #tpu.pipeline_mode<synchronous>, transform_indices = @transform_1, window_bounds = array<i64: 32, 64>}, {pipeline_mode = #tpu.pipeline_mode<synchronous>, transform_indices = @transform_2, window_bounds = array<i64: 1, 64>}, {pipeline_mode = #tpu.pipeline_mode<synchronous>, transform_indices = @transform_3, window_bounds = array<i64: 64, 32>}, {pipeline_mode = #tpu.pipeline_mode<synchronous>, transform_indices = @transform_4, window_bounds = array<i64: 1, 32>}, {pipeline_mode = #tpu.pipeline_mode<synchronous>, transform_indices = @transform_5, window_bounds = array<i64: 32, 1>}, {pipeline_mode = #tpu.pipeline_mode<synchronous>, transform_indices = @transform_6, window_bounds = array<i64: 1, 1>}, {transform_indices = @transform_7, window_bounds = array<i64: 8, 1>}]} {
    %c0 = arith.constant 0 : index
    %c0_0 = arith.constant 0 : index
    %0 = vector.load %arg1[%c0, %c0_0] : memref<8x32xf32, #tpu.memory_space<vmem>>, vector<8x32xf32>
    %c0_1 = arith.constant 0 : index
    %c0_2 = arith.constant 0 : index
    %1 = vector.load %arg2[%c0_1, %c0_2] : memref<32x64xf32, #tpu.memory_space<vmem>>, vector<32x64xf32>
    %c0_3 = arith.constant 0 : index
    %c0_4 = arith.constant 0 : index
    %2 = vector.load %arg3[%c0_3, %c0_4] : memref<1x64xf32, #tpu.memory_space<vmem>>, vector<1x64xf32>
    %cst = arith.constant dense<0.000000e+00> : vector<8x64xf32>
    %3 = tpu.matmul %0, %1, %cst {dimension_numbers = #tpu.dot_dimension_numbers<[1], [0], [0], [1], [0, 0, 1, 1], [], []>} : vector<8x32xf32>, vector<32x64xf32>, vector<8x64xf32> -> vector<8x64xf32>
    %4 = vector.broadcast %2 : vector<1x64xf32> to vector<8x64xf32>
    %5 = arith.addf %3, %4 : vector<8x64xf32>
    %cst_5 = arith.constant 0.000000e+00 : f32
    %6 = vector.broadcast %cst_5 : f32 to vector<8x64xf32>
    %7 = arith.maximumf %5, %6 : vector<8x64xf32>
    %c0_6 = arith.constant 0 : index
    %c0_7 = arith.constant 0 : index
    %8 = vector.load %arg4[%c0_6, %c0_7] : memref<64x32xf32, #tpu.memory_space<vmem>>, vector<64x32xf32>
    %c0_8 = arith.constant 0 : index
    %c0_9 = arith.constant 0 : index
    %9 = vector.load %arg5[%c0_8, %c0_9] : memref<1x32xf32, #tpu.memory_space<vmem>>, vector<1x32xf32>
    %cst_10 = arith.constant dense<0.000000e+00> : vector<8x32xf32>
    %10 = tpu.matmul %7, %8, %cst_10 {dimension_numbers = #tpu.dot_dimension_numbers<[1], [0], [0], [1], [0, 0, 1, 1], [], []>} : vector<8x64xf32>, vector<64x32xf32>, vector<8x32xf32> -> vector<8x32xf32>
    %11 = vector.broadcast %9 : vector<1x32xf32> to vector<8x32xf32>
    %12 = arith.addf %10, %11 : vector<8x32xf32>
    %cst_11 = arith.constant 0.000000e+00 : f32
    %13 = vector.broadcast %cst_11 : f32 to vector<8x32xf32>
    %14 = arith.maximumf %12, %13 : vector<8x32xf32>
    %c0_12 = arith.constant 0 : index
    %c0_13 = arith.constant 0 : index
    %15 = vector.load %arg6[%c0_12, %c0_13] : memref<32x1xf32, #tpu.memory_space<vmem>>, vector<32x1xf32>
    %c0_14 = arith.constant 0 : index
    %c0_15 = arith.constant 0 : index
    %16 = vector.load %arg7[%c0_14, %c0_15] : memref<1x1xf32, #tpu.memory_space<vmem>>, vector<1x1xf32>
    %cst_16 = arith.constant dense<0.000000e+00> : vector<8x1xf32>
    %17 = tpu.matmul %14, %15, %cst_16 {dimension_numbers = #tpu.dot_dimension_numbers<[1], [0], [0], [1], [0, 0, 1, 1], [], []>} : vector<8x32xf32>, vector<32x1xf32>, vector<8x1xf32> -> vector<8x1xf32>
    %18 = vector.broadcast %16 : vector<1x1xf32> to vector<8x1xf32>
    %19 = arith.addf %17, %18 : vector<8x1xf32>
    %c0_17 = arith.constant 0 : index
    %c0_18 = arith.constant 0 : index
    %20 = vector.load %arg8[%c0_17, %c0_18] : memref<8x1xf32, #tpu.memory_space<vmem>>, vector<8x1xf32>
    tpu.vector_store %arg8[%c0_17, %c0_18], %19 {strides = array<i32>} : memref<8x1xf32, #tpu.memory_space<vmem>>, vector<8x1xf32>,
    return
  }
  func.func @transform_0(%arg0: i32) -> (i32, i32) {
    %c0_i32 = arith.constant 0 : i32
    %c0_i32_0 = arith.constant 0 : i32
    return %arg0, %c0_i32 : i32, i32
  }
  func.func @transform_1(%arg0: i32) -> (i32, i32) {
    %c0_i32 = arith.constant 0 : i32
    %c0_i32_0 = arith.constant 0 : i32
    %c0_i32_1 = arith.constant 0 : i32
    return %c0_i32, %c0_i32_0 : i32, i32
  }
  func.func @transform_2(%arg0: i32) -> (i32, i32) {
    %c0_i32 = arith.constant 0 : i32
    %c0_i32_0 = arith.constant 0 : i32
    %c0_i32_1 = arith.constant 0 : i32
    return %c0_i32, %c0_i32_0 : i32, i32
  }
  func.func @transform_3(%arg0: i32) -> (i32, i32) {
    %c0_i32 = arith.constant 0 : i32
    %c0_i32_0 = arith.constant 0 : i32
    %c0_i32_1 = arith.constant 0 : i32
    return %c0_i32, %c0_i32_0 : i32, i32
  }
  func.func @transform_4(%arg0: i32) -> (i32, i32) {
    %c0_i32 = arith.constant 0 : i32
    %c0_i32_0 = arith.constant 0 : i32
    %c0_i32_1 = arith.constant 0 : i32
    return %c0_i32, %c0_i32_0 : i32, i32
  }
  func.func @transform_5(%arg0: i32) -> (i32, i32) {
    %c0_i32 = arith.constant 0 : i32
    %c0_i32_0 = arith.constant 0 : i32
    %c0_i32_1 = arith.constant 0 : i32
    return %c0_i32, %c0_i32_0 : i32, i32
  }
  func.func @transform_6(%arg0: i32) -> (i32, i32) {
    %c0_i32 = arith.constant 0 : i32
    %c0_i32_0 = arith.constant 0 : i32
    %c0_i32_1 = arith.constant 0 : i32
    return %c0_i32, %c0_i32_0 : i32, i32
  }
  func.func @transform_7(%arg0: i32) -> (i32, i32) {
    %c0_i32 = arith.constant 0 : i32
    %c0_i32_0 = arith.constant 0 : i32
    return %arg0, %c0_i32 : i32, i32
  }
}

</mosaic_0001>

<llo_original>
// kernel: tpu_custom_call.1
$region0: #{tpu_custom_call.1}
  #allocation0 [shape = 'u32[]', space=smem, size = 0x4, offset = 0x4, fixed_abs, tag = 'smem constant byte address 0x4 - core index']
  #allocation1 [shape = 'u32[72,128]{1,0:T(1,128)}', space=vmem, size = 0x9000, scoped, tag = 'internal scratch']
  #allocation2 [shape = 'f32[1,1]{1,0:T(1,128)S(1)}', space=vmem, size = 0x200, scoped, tag = 'scoped memory for tpu_custom_call.1']
  %s0 = inlined_call_operand.vmem [shape: f32[8,32], index: 0, kind: input, shape index: {}]
  %s1 = inlined_call_operand.vmem [shape: f32[32,64], index: 1, kind: input, shape index: {}]
  %s2 = inlined_call_operand.vmem [shape: f32[1,64], index: 2, kind: input, shape index: {}]
  %s3 = inlined_call_operand.vmem [shape: f32[64,32], index: 3, kind: input, shape index: {}]
  %s4 = inlined_call_operand.vmem [shape: f32[1,32], index: 4, kind: input, shape index: {}]
  %s5 = inlined_call_operand.vmem [shape: f32[32,1], index: 5, kind: input, shape index: {}]
  %s6 = inlined_call_operand.<no memory space> [shape: f32[1,1], index: 6, kind: input, shape index: {}]
  %s7 = inlined_call_operand.vmem [shape: f32[8,1], index: 7, kind: output, shape index: {}]
  %s8 = sld [smem:[#allocation0]]
  $region38: #{tpu_custom_call.1} parent=0
    _
  %s10 = ssub.s32 1, %s8
  %s11 = scalar_select 0, %s10, %s8
  %v12 = vstv %s6
  %13 = vst [vmem:[#allocation2] sm:$0x1] %v12
  // Predicated region
  $region2: #{tpu_custom_call.1} parent=0 // pred_check
    _
  $region3: #{tpu_custom_call.1} parent=0 // pred_check_branch
    %15 = sbr.rel (0) target = $region5
  $region4: #{tpu_custom_call.1} parent=0 // pred_region
    _
  $region5: #{tpu_custom_call.1} parent=0 // pred_fallthru
    _
  // Predicated region
  $region6: #{tpu_custom_call.1} parent=0 // pred_check
    _
  $region7: #{tpu_custom_call.1} parent=0 // pred_check_branch
    %17 = sbr.rel (0) target = $region9
  $region8: #{tpu_custom_call.1} parent=0 // pred_region
    _
  $region9: #{tpu_custom_call.1} parent=0 // pred_fallthru
    _
  // Predicated region
  $region10: #{tpu_custom_call.1} parent=0 // pred_check
    _
  $region11: #{tpu_custom_call.1} parent=0 // pred_check_branch
    %19 = sbr.rel (0) target = $region13
  $region12: #{tpu_custom_call.1} parent=0 // pred_region
    _
  $region13: #{tpu_custom_call.1} parent=0 // pred_fallthru
    _
  // Predicated region
  $region14: #{tpu_custom_call.1} parent=0 // pred_check
    _
  $region15: #{tpu_custom_call.1} parent=0 // pred_check_branch
    %21 = sbr.rel (0) target = $region17
  $region16: #{tpu_custom_call.1} parent=0 // pred_region
    _
  $region17: #{tpu_custom_call.1} parent=0 // pred_fallthru
    _
  // Predicated region
  $region18: #{tpu_custom_call.1} parent=0 // pred_check
    _
  $region19: #{tpu_custom_call.1} parent=0 // pred_check_branch
    %23 = sbr.rel (0) target = $region21
  $region20: #{tpu_custom_call.1} parent=0 // pred_region
    _
  $region21: #{tpu_custom_call.1} parent=0 // pred_fallthru
    _
  // Predicated region
  $region22: #{tpu_custom_call.1} parent=0 // pred_check
    _
  $region23: #{tpu_custom_call.1} parent=0 // pred_check_branch
    %25 = sbr.rel (0) target = $region25
  $region24: #{tpu_custom_call.1} parent=0 // pred_region
    _
  $region25: #{tpu_custom_call.1} parent=0 // pred_fallthru
    _
  // Predicated region
  $region26: #{tpu_custom_call.1} parent=0 // pred_check
    _
  $region27: #{tpu_custom_call.1} parent=0 // pred_check_branch
    %27 = sbr.rel (0) target = $region29
  $region28: #{tpu_custom_call.1} parent=0 // pred_region
    _
  $region29: #{tpu_custom_call.1} parent=0 // pred_fallthru
    _
  %v28 = vld [vmem:[%s0] sm:$0xff]
  %v29 = vld [vmem:[%s1] sm:$0xff]
  %v30 = vld [vmem:[%s1 + $0x8] sm:$0xff]
  %v31 = vld [vmem:[%s1 + $0x10] sm:$0xff]
  %v32 = vld [vmem:[%s1 + $0x18] sm:$0xff]
  %v33 = vld [vmem:[%s2] sm:$0x1]
  %v35 = vperm.slane %v33, 0
  %vm37 = vcmask 261120
  %v39 = vsel %vm37, %v28, 0
  %41 = vmatpush.msra.mxu0 0.0
  %42 = vmatpush.msra.mxu0 0.0
  %43 = vmatpush.msra.mxu0 0.0
  %44 = vmatpush.msra.mxu0 0.0
  %45 = vmatpush.msra.mxu0 0.0
  %46 = vmatpush.msra.mxu0 0.0
  %47 = vmatpush.msra.mxu0 0.0
  %48 = vmatpush.msra.mxu0 0.0
  %49 = vmatpush.msra.mxu0 0.0
  %50 = vmatpush.msra.mxu0 0.0
  %51 = vmatpush.msra.mxu0 0.0
  %52 = vmatpush.msra.mxu0 0.0
  %53 = vmatpush.msra.mxu0 %v32
  %54 = vmatpush.msra.mxu0 %v31
  %55 = vmatpush.msra.mxu0 %v30
  %56 = vmatpush.msra.mxu0 %v29
  %57 = vmatmul.f32.gmra.mxu0 %v39
  %v58 = vpop.f32.mrf.mxu0
  %v59 = vadd.f32 %v35, %v58
  %60 = vdwg.mxu0
  %v61 = vmax.f32 %v59, 0.0
  %v62 = vld [vmem:[%s3] sm:$0xff]
  %v63 = vld [vmem:[%s3 + $0x8] sm:$0xff]
  %v64 = vld [vmem:[%s3 + $0x10] sm:$0xff]
  %v65 = vld [vmem:[%s3 + $0x18] sm:$0xff]
  %v66 = vld [vmem:[%s3 + $0x20] sm:$0xff]
  %v67 = vld [vmem:[%s3 + $0x28] sm:$0xff]
  %v68 = vld [vmem:[%s3 + $0x30] sm:$0xff]
  %v69 = vld [vmem:[%s3 + $0x38] sm:$0xff]
  %v70 = vld [vmem:[%s4] sm:$0x1]
  %v72 = vperm.slane %v70, 0
  %vm74 = vcmask 523264
  %v76 = vsel %vm74, %v61, 0
  %78 = vmatpush.msra.mxu0 0.0
  %79 = vmatpush.msra.mxu0 0.0
  %80 = vmatpush.msra.mxu0 0.0
  %81 = vmatpush.msra.mxu0 0.0
  %82 = vmatpush.msra.mxu0 0.0
  %83 = vmatpush.msra.mxu0 0.0
  %84 = vmatpush.msra.mxu0 0.0
  %85 = vmatpush.msra.mxu0 0.0
  %86 = vmatpush.msra.mxu0 %v69
  %87 = vmatpush.msra.mxu0 %v68
  %88 = vmatpush.msra.mxu0 %v67
  %89 = vmatpush.msra.mxu0 %v66
  %90 = vmatpush.msra.mxu0 %v65
  %91 = vmatpush.msra.mxu0 %v64
  %92 = vmatpush.msra.mxu0 %v63
  %93 = vmatpush.msra.mxu0 %v62
  %94 = vmatmul.f32.gmra.mxu0 %v76
  %v95 = vpop.f32.mrf.mxu0
  %v96 = vadd.f32 %v72, %v95
  %97 = vdwg.mxu0
  %v98 = vmax.f32 %v96, 0.0
  %v99 = vld [vmem:[%s5] sm:$0xff]
  %v100 = vld [vmem:[%s5 + $0x8] sm:$0xff]
  %v101 = vld [vmem:[%s5 + $0x10] sm:$0xff]
  %v102 = vld [vmem:[%s5 + $0x18] sm:$0xff]
  %v103 = vld [vmem:[#allocation2] sm:$0x1]
  %v105 = vperm.slane %v103, 0
  %v108 = vsel %vm37, %v98, 0
  %110 = vmatpush.msra.mxu0 0.0
  %111 = vmatpush.msra.mxu0 0.0
  %112 = vmatpush.msra.mxu0 0.0
  %113 = vmatpush.msra.mxu0 0.0
  %114 = vmatpush.msra.mxu0 0.0
  %115 = vmatpush.msra.mxu0 0.0
  %116 = vmatpush.msra.mxu0 0.0
  %117 = vmatpush.msra.mxu0 0.0
  %118 = vmatpush.msra.mxu0 0.0
  %119 = vmatpush.msra.mxu0 0.0
  %120 = vmatpush.msra.mxu0 0.0
  %121 = vmatpush.msra.mxu0 0.0
  %122 = vmatpush.msra.mxu0 %v102
  %123 = vmatpush.msra.mxu0 %v101
  %124 = vmatpush.msra.mxu0 %v100
  %125 = vmatpush.msra.mxu0 %v99
  %126 = vmatmul.f32.gmra.mxu0 %v108
  %v127 = vpop.f32.mrf.mxu0
  %v128 = vadd.f32 %v105, %v127
  %129 = vdwg.mxu0
  %vm130 = vcmask 7168
  %131 = vst.msk [vmem:[%s7] sm:$0xff] %vm130, %v128
  // Predicated region
  $region30: #{tpu_custom_call.1} parent=0 // pred_check
    _
  $region31: #{tpu_custom_call.1} parent=0 // pred_check_branch
    %133 = sbr.rel (0) target = $region33
  $region32: #{tpu_custom_call.1} parent=0 // pred_region
    _
  $region33: #{tpu_custom_call.1} parent=0 // pred_fallthru
    _
  // Predicated region
  $region34: #{tpu_custom_call.1} parent=0 // pred_check
    _
  $region35: #{tpu_custom_call.1} parent=0 // pred_check_branch
    %135 = sbr.rel (0) target = $region37
  $region36: #{tpu_custom_call.1} parent=0 // pred_region
    _
  $region37: #{tpu_custom_call.1} parent=0 // pred_fallthru
    _

</llo_original>
